<compile_context>
chip_gen: v5e
topology: v5e:2x2
jax: 0.10.0
libtpu: 0.0.40
codegen_flags: <defaults>
</compile_context>

<pallas_src>
import functools

import jax
import jax.numpy as jnp
from jax.experimental import pallas as pl
from jax.experimental.pallas import tpu as pltpu


def _round_up(n, m):
    return ((n + m - 1) // m) * m


def _choose_tiles(M, E, Hp, itemsize, vmem_budget=40 * 1024 * 1024):
    """Pick (tm, tH) so the streamed working set fits a conservative VMEM budget."""
    tm_candidates = (M,) if M <= 256 else (256, 128, 64, 32)
    tH_candidates = (512, 256, 128)  # Hp is a multiple of 128, so 128 always divides
    chosen = None
    for tm in tm_candidates:
        for tH in tH_candidates:
            if Hp % tH:
                continue
            need = itemsize * (
                2 * tm * E          # x row tile (double-buffered)
                + 2 * E * 2 * tH    # fused W1|W2 tile (double-buffered)
                + 2 * tH * E        # W3 tile (double-buffered)
                + 2 * tm * E        # output tile (double-buffered)
            )
            need += 4 * (2 * 2 * tH + E)   # biases (kept f32)
            need += 4 * tm * E             # f32 accumulator scratch
            chosen = (tm, tH, need)
            if need <= vmem_budget:
                return tm, tH, need
    return chosen  # smallest combination if nothing fit the budget


def _swiglu_kernel(x_ref, w12_ref, b12_ref, w3_ref, b3_ref, o_ref, acc_ref, *, tH):
    """One (tm, E) row tile x one hidden tile; accumulates proj3 across h."""
    h = pl.program_id(1)

    @pl.when(h == 0)
    def _init():
        acc_ref[...] = jnp.zeros_like(acc_ref)

    # Fused first stage: (tm, E) @ (E, 2*tH) -> (tm, 2*tH), f32 accumulate.
    hh = jnp.dot(x_ref[...], w12_ref[...], preferred_element_type=jnp.float32)
    hh = hh + b12_ref[...]
    h1 = hh[:, :tH]                      # proj1 slice (lane-aligned)
    h2 = hh[:, tH:]                      # proj2 slice
    g = (h1 * jax.nn.sigmoid(h1)) * h2   # SiLU gate, f32 elementwise

    # proj3 partial product for this hidden tile, accumulated across h.
    acc_ref[...] += jnp.dot(g.astype(w3_ref.dtype), w3_ref[...],
                            preferred_element_type=jnp.float32)

    @pl.when(h == pl.num_programs(1) - 1)
    def _finalize():
        o_ref[...] = (acc_ref[...] + b3_ref[...]).astype(o_ref.dtype)


@functools.partial(jax.jit, static_argnames=("use_bf16",))
def swiglu(x, w1, b1, w2, b2, w3, b3, *, use_bf16=False):
    """x: (B, S, E) -> (B, S, E). Entire SwiGLU (3 matmuls + gate) in Pallas."""
    B, S, E = x.shape
    H = w1.shape[1]
    M = B * S
    x2d = x.reshape(M, E)

    mxu_dtype = jnp.bfloat16 if use_bf16 else x.dtype
    itemsize = jnp.dtype(mxu_dtype).itemsize

    # Pad the hidden dim to a multiple of 128 so hidden tiles are lane-aligned.
    # Mathematically a no-op: padded columns give g == 0 against zero W3 rows.
    Hp = _round_up(H, 128)
    tm, tH, vmem_need = _choose_tiles(M, E, Hp, itemsize)
    Mt = pl.cdiv(M, tm)
    Ht = Hp // tH

    if Hp != H:
        w1 = jnp.pad(w1, ((0, 0), (0, Hp - H)))
        w2 = jnp.pad(w2, ((0, 0), (0, Hp - H)))
        b1 = jnp.pad(b1, (0, Hp - H))
        b2 = jnp.pad(b2, (0, Hp - H))
        w3 = jnp.pad(w3, ((0, Hp - H), (0, 0)))

    # Fuse W1|W2 per hidden tile: columns [h*2tH, (h+1)*2tH) hold
    # [W1 tile h | W2 tile h], matching the in-kernel slice of hh.
    w12 = jnp.concatenate(
        [w1.reshape(E, Ht, tH), w2.reshape(E, Ht, tH)], axis=2
    ).reshape(E, 2 * Hp)
    b12 = jnp.concatenate(
        [b1.reshape(Ht, tH), b2.reshape(Ht, tH)], axis=1
    ).reshape(1, 2 * Hp).astype(jnp.float32)
    b3r = b3.reshape(1, E).astype(jnp.float32)

    x2d = x2d.astype(mxu_dtype)
    w12 = w12.astype(mxu_dtype)
    w3c = w3.astype(mxu_dtype)

    cost = pl.CostEstimate(
        flops=6 * M * E * Hp,                 # 2*M*E*(2Hp) + 2*M*Hp*E
        transcendentals=M * Hp,               # sigmoid
        bytes_accessed=itemsize * (2 * M * E + Mt * (2 * E * Hp + Hp * E))
        + 4 * (2 * Hp + E),
    )
    vmem_limit = int(min(max(int(1.25 * vmem_need) + (2 << 20), 32 << 20), 64 << 20))

    out2d = pl.pallas_call(
        functools.partial(_swiglu_kernel, tH=tH),
        out_shape=jax.ShapeDtypeStruct((M, E), x.dtype),
        grid_spec=pltpu.PrefetchScalarGridSpec(
            num_scalar_prefetch=0,
            grid=(Mt, Ht),
            in_specs=[
                pl.BlockSpec((tm, E), lambda i, h: (i, 0)),       # x row tile
                pl.BlockSpec((E, 2 * tH), lambda i, h: (0, h)),   # fused W1|W2 tile
                pl.BlockSpec((1, 2 * tH), lambda i, h: (0, h)),   # fused b1|b2 tile
                pl.BlockSpec((tH, E), lambda i, h: (h, 0)),       # W3 tile
                pl.BlockSpec((1, E), lambda i, h: (0, 0)),        # b3
            ],
            out_specs=pl.BlockSpec((tm, E), lambda i, h: (i, 0)),
            scratch_shapes=[pltpu.VMEM((tm, E), jnp.float32)],    # proj3 accumulator
        ),
        compiler_params=pltpu.CompilerParams(
            dimension_semantics=("parallel", "arbitrary"),
            vmem_limit_bytes=vmem_limit,
        ),
        cost_estimate=cost,
    )(x2d, w12, b12, w3c, b3r)

    return out2d.reshape(B, S, E)


def swiglu_reference(x, w1, b1, w2, b2, w3, b3):
    """Pure-JAX reference matching the PyTorch forward."""
    h1 = jax.nn.silu(x @ w1 + b1)
    h2 = x @ w2 + b2
    return (h1 * h2) @ w3 + b3


if __name__ == "__main__":
    # --- Test 1: module-consistent toy shape (embed_dim=48 -> hidden=128). ---
    batch, seq, embed_dim = 2, 8, 48
    hidden_dim = int(8 / 3 * embed_dim)  # 128

    k = jax.random.split(jax.random.PRNGKey(0), 7)
    x = jax.random.normal(k[0], (batch, seq, embed_dim), dtype=jnp.float32)
    w1 = jax.random.normal(k[1], (embed_dim, hidden_dim), dtype=jnp.float32) * 0.05
    b1 = jax.random.normal(k[2], (hidden_dim,), dtype=jnp.float32) * 0.01
    w2 = jax.random.normal(k[3], (embed_dim, hidden_dim), dtype=jnp.float32) * 0.05
    b2 = jax.random.normal(k[4], (hidden_dim,), dtype=jnp.float32) * 0.01
    w3 = jax.random.normal(k[5], (hidden_dim, embed_dim), dtype=jnp.float32) * 0.05
    b3 = jax.random.normal(k[6], (embed_dim,), dtype=jnp.float32) * 0.01

    out = jax.block_until_ready(swiglu(x, w1, b1, w2, b2, w3, b3))
    ref = swiglu_reference(x, w1, b1, w2, b2, w3, b3)
    assert out.shape == (batch, seq, embed_dim)
    assert jnp.allclose(out, ref, atol=1e-4, rtol=1e-4), "toy-shape mismatch"

    # --- Test 2: exercises M-tiling, hidden-dim tiling + padding, accumulator. ---
    batch2, seq2, embed2 = 2, 256, 256
    hidden2 = int(8 / 3 * embed2)  # 682 -> padded to 768 inside the wrapper

    k2 = jax.random.split(jax.random.PRNGKey(1), 7)
    x2 = jax.random.normal(k2[0], (batch2, seq2, embed2), dtype=jnp.float32)
    w1b = jax.random.normal(k2[1], (embed2, hidden2), dtype=jnp.float32) * 0.02
    b1b = jax.random.normal(k2[2], (hidden2,), dtype=jnp.float32) * 0.01
    w2b = jax.random.normal(k2[3], (embed2, hidden2), dtype=jnp.float32) * 0.02
    b2b = jax.random.normal(k2[4], (hidden2,), dtype=jnp.float32) * 0.01
    w3b = jax.random.normal(k2[5], (hidden2, embed2), dtype=jnp.float32) * 0.02
    b3b = jax.random.normal(k2[6], (embed2,), dtype=jnp.float32) * 0.01

    out2 = jax.block_until_ready(swiglu(x2, w1b, b1b, w2b, b2b, w3b, b3b))
    ref2 = swiglu_reference(x2, w1b, b1b, w2b, b2b, w3b, b3b)
    assert jnp.allclose(out2, ref2, atol=5e-4, rtol=5e-4), "tiled-shape mismatch"

    print("KERNEL_OK")
</pallas_src>

<mosaic_0001>
module attributes {stable_mosaic.version = 11 : i64} {
  func.func @_swiglu_kernel(%arg0: i32, %arg1: i32, %arg2: memref<16x48xf32, #tpu.memory_space<vmem>>, %arg3: memref<48x256xf32, #tpu.memory_space<vmem>>, %arg4: memref<1x256xf32, #tpu.memory_space<vmem>>, %arg5: memref<128x48xf32, #tpu.memory_space<vmem>>, %arg6: memref<1x48xf32, #tpu.memory_space<vmem>>, %arg7: memref<16x48xf32, #tpu.memory_space<vmem>>, %arg8: memref<16x48xf32, #tpu.memory_space<vmem>>) attributes {dimension_semantics = [#tpu.dimension_semantics<parallel>, #tpu.dimension_semantics<arbitrary>], iteration_bounds = array<i64: 1, 1>, scalar_prefetch = 0 : i64, scratch_operands = 1 : i64, tpu.core_type = #tpu.core_type<tc>, window_params = [{transform_indices = @transform_0, window_bounds = array<i64: 16, 48>}, {transform_indices = @transform_1, window_bounds = array<i64: 48, 256>}, {transform_indices = @transform_2, window_bounds = array<i64: 1, 256>}, {transform_indices = @transform_3, window_bounds = array<i64: 128, 48>}, {pipeline_mode = #tpu.pipeline_mode<synchronous>, transform_indices = @transform_4, window_bounds = array<i64: 1, 48>}, {transform_indices = @transform_5, window_bounds = array<i64: 16, 48>}]} {
    %c0_i32 = arith.constant 0 : i32
    %0 = arith.cmpi eq, %arg1, %c0_i32 : i32
    %1 = arith.extui %0 : i1 to i32
    %c0_i32_0 = arith.constant 0 : i32
    %2 = arith.cmpi ne, %1, %c0_i32_0 : i32
    scf.if %2 {
      %cst_16 = arith.constant 0.000000e+00 : f32
      %26 = vector.broadcast %cst_16 : f32 to vector<16x48xf32>
      %c0_17 = arith.constant 0 : index
      %c0_18 = arith.constant 0 : index
      %27 = vector.load %arg8[%c0_17, %c0_18] : memref<16x48xf32, #tpu.memory_space<vmem>>, vector<16x48xf32>
      tpu.vector_store %arg8[%c0_17, %c0_18], %26 {strides = array<i32>} : memref<16x48xf32, #tpu.memory_space<vmem>>, vector<16x48xf32>,
    } else {
    }
    %c0 = arith.constant 0 : index
    %c0_1 = arith.constant 0 : index
    %3 = vector.load %arg2[%c0, %c0_1] : memref<16x48xf32, #tpu.memory_space<vmem>>, vector<16x48xf32>
    %c0_2 = arith.constant 0 : index
    %c0_3 = arith.constant 0 : index
    %4 = vector.load %arg3[%c0_2, %c0_3] : memref<48x256xf32, #tpu.memory_space<vmem>>, vector<48x256xf32>
    %cst = arith.constant dense<0.000000e+00> : vector<16x256xf32>
    %5 = tpu.matmul %3, %4, %cst {dimension_numbers = #tpu.dot_dimension_numbers<[1], [0], [0], [1], [0, 0, 1, 1], [], []>} : vector<16x48xf32>, vector<48x256xf32>, vector<16x256xf32> -> vector<16x256xf32>
    %c0_4 = arith.constant 0 : index
    %c0_5 = arith.constant 0 : index
    %6 = vector.load %arg4[%c0_4, %c0_5] : memref<1x256xf32, #tpu.memory_space<vmem>>, vector<1x256xf32>
    %7 = vector.broadcast %6 : vector<1x256xf32> to vector<16x256xf32>
    %8 = arith.addf %5, %7 : vector<16x256xf32>
    %9 = vector.extract_strided_slice %8 {offsets = [0, 0], sizes = [16, 128], strides = [1, 1]} : vector<16x256xf32> to vector<16x128xf32>
    %10 = vector.extract_strided_slice %8 {offsets = [0, 128], sizes = [16, 128], strides = [1, 1]} : vector<16x256xf32> to vector<16x128xf32>
    %11 = arith.negf %9 : vector<16x128xf32>
    %12 = math.exp %11 : vector<16x128xf32>
    %cst_6 = arith.constant 1.000000e+00 : f32
    %13 = vector.broadcast %cst_6 : f32 to vector<16x128xf32>
    %14 = arith.addf %13, %12 : vector<16x128xf32>
    %15 = arith.divf %13, %14 : vector<16x128xf32>
    %16 = arith.mulf %9, %15 : vector<16x128xf32>
    %17 = arith.mulf %16, %10 : vector<16x128xf32>
    %c0_7 = arith.constant 0 : index
    %c0_8 = arith.constant 0 : index
    %18 = vector.load %arg8[%c0_7, %c0_8] : memref<16x48xf32, #tpu.memory_space<vmem>>, vector<16x48xf32>
    %c0_9 = arith.constant 0 : index
    %c0_10 = arith.constant 0 : index
    %19 = vector.load %arg5[%c0_9, %c0_10] : memref<128x48xf32, #tpu.memory_space<vmem>>, vector<128x48xf32>
    %cst_11 = arith.constant dense<0.000000e+00> : vector<16x48xf32>
    %20 = tpu.matmul %17, %19, %cst_11 {dimension_numbers = #tpu.dot_dimension_numbers<[1], [0], [0], [1], [0, 0, 1, 1], [], []>} : vector<16x128xf32>, vector<128x48xf32>, vector<16x48xf32> -> vector<16x48xf32>
    %21 = arith.addf %18, %20 : vector<16x48xf32>
    %c0_12 = arith.constant 0 : index
    %c0_13 = arith.constant 0 : index
    %22 = vector.load %arg8[%c0_12, %c0_13] : memref<16x48xf32, #tpu.memory_space<vmem>>, vector<16x48xf32>
    tpu.vector_store %arg8[%c0_12, %c0_13], %21 {strides = array<i32>} : memref<16x48xf32, #tpu.memory_space<vmem>>, vector<16x48xf32>,
    %c0_i32_14 = arith.constant 0 : i32
    %23 = arith.cmpi eq, %arg1, %c0_i32_14 : i32
    %24 = arith.extui %23 : i1 to i32
    %c0_i32_15 = arith.constant 0 : i32
    %25 = arith.cmpi ne, %24, %c0_i32_15 : i32
    scf.if %25 {
      %c0_16 = arith.constant 0 : index
      %c0_17 = arith.constant 0 : index
      %26 = vector.load %arg8[%c0_16, %c0_17] : memref<16x48xf32, #tpu.memory_space<vmem>>, vector<16x48xf32>
      %c0_18 = arith.constant 0 : index
      %c0_19 = arith.constant 0 : index
      %27 = vector.load %arg6[%c0_18, %c0_19] : memref<1x48xf32, #tpu.memory_space<vmem>>, vector<1x48xf32>
      %28 = vector.broadcast %27 : vector<1x48xf32> to vector<16x48xf32>
      %29 = arith.addf %26, %28 : vector<16x48xf32>
      %c0_20 = arith.constant 0 : index
      %c0_21 = arith.constant 0 : index
      %30 = vector.load %arg7[%c0_20, %c0_21] : memref<16x48xf32, #tpu.memory_space<vmem>>, vector<16x48xf32>
      tpu.vector_store %arg7[%c0_20, %c0_21], %29 {strides = array<i32>} : memref<16x48xf32, #tpu.memory_space<vmem>>, vector<16x48xf32>,
    } else {
    }
    return
  }
  func.func @transform_0(%arg0: i32, %arg1: i32) -> (i32, i32) {
    %c0_i32 = arith.constant 0 : i32
    %c0_i32_0 = arith.constant 0 : i32
    return %arg0, %c0_i32 : i32, i32
  }
  func.func @transform_1(%arg0: i32, %arg1: i32) -> (i32, i32) {
    %c0_i32 = arith.constant 0 : i32
    %c0_i32_0 = arith.constant 0 : i32
    return %c0_i32, %arg1 : i32, i32
  }
  func.func @transform_2(%arg0: i32, %arg1: i32) -> (i32, i32) {
    %c0_i32 = arith.constant 0 : i32
    %c0_i32_0 = arith.constant 0 : i32
    return %c0_i32, %arg1 : i32, i32
  }
  func.func @transform_3(%arg0: i32, %arg1: i32) -> (i32, i32) {
    %c0_i32 = arith.constant 0 : i32
    %c0_i32_0 = arith.constant 0 : i32
    return %arg1, %c0_i32 : i32, i32
  }
  func.func @transform_4(%arg0: i32, %arg1: i32) -> (i32, i32) {
    %c0_i32 = arith.constant 0 : i32
    %c0_i32_0 = arith.constant 0 : i32
    %c0_i32_1 = arith.constant 0 : i32
    return %c0_i32, %c0_i32_0 : i32, i32
  }
  func.func @transform_5(%arg0: i32, %arg1: i32) -> (i32, i32) {
    %c0_i32 = arith.constant 0 : i32
    %c0_i32_0 = arith.constant 0 : i32
    return %arg0, %c0_i32 : i32, i32
  }
}

</mosaic_0001>

<llo_original>
// kernel: swiglu.1
$region0: #{swiglu.1}
  #allocation0 [shape = 'u32[]', space=smem, size = 0x4, offset = 0x4, fixed_abs, tag = 'smem constant byte address 0x4 - core index']
  #allocation1 [shape = 'u32[72,128]{1,0:T(1,128)}', space=vmem, size = 0x9000, scoped, tag = 'internal scratch']
  #allocation2 [shape = 'f32[16,48]{1,0:T(8,128)}', space=vmem, size = 0x2000, scoped, tag = 'scratch operand']
  %s0 = inlined_call_operand.vmem [shape: f32[16,48], index: 0, kind: input, shape index: {}]
  %s1 = inlined_call_operand.vmem [shape: f32[48,256], index: 1, kind: input, shape index: {}]
  %s2 = inlined_call_operand.vmem [shape: f32[1,256], index: 2, kind: input, shape index: {}]
  %s3 = inlined_call_operand.vmem [shape: f32[128,48], index: 3, kind: input, shape index: {}]
  %s4 = inlined_call_operand.vmem [shape: f32[1,48], index: 4, kind: input, shape index: {}]
  %s5 = inlined_call_operand.hbm [shape: f32[16,48], index: 5, kind: output, shape index: {}]
  %s6 = sld [smem:[#allocation0]]
  $region38: #{swiglu.1} parent=0
    _
  %s8 = ssub.s32 1, %s6
  %s9 = scalar_select 0, %s8, %s6
  $region1: #{swiglu.1} parent=0
    #allocation3 [shape = 'u8[8192]{0}', space=vmem, size = 0x2000, scoped, tag = 'output window, operand 0, single buffered']
    #allocation4 [shape = 's32[1]{0}', space=sflag, size = 0x4, scoped, tag = 'scoped memory for swiglu.1']
    %10 = vsyncpa [#allocation4], 0
    // Predicated region
    $region2: #{swiglu.1} parent=1 // pred_check
      _
    $region3: #{swiglu.1} parent=1 // pred_check_branch
      %12 = sbr.rel (0) target = $region5
    $region4: #{swiglu.1} parent=1 // pred_region
      _
    $region5: #{swiglu.1} parent=1 // pred_fallthru
      _
    // Predicated region
    $region6: #{swiglu.1} parent=1 // pred_check
      _
    $region7: #{swiglu.1} parent=1 // pred_check_branch
      %14 = sbr.rel (0) target = $region9
    $region8: #{swiglu.1} parent=1 // pred_region
      _
    $region9: #{swiglu.1} parent=1 // pred_fallthru
      _
    // Predicated region
    $region10: #{swiglu.1} parent=1 // pred_check
      _
    $region11: #{swiglu.1} parent=1 // pred_check_branch
      %16 = sbr.rel (0) target = $region13
    $region12: #{swiglu.1} parent=1 // pred_region
      _
    $region13: #{swiglu.1} parent=1 // pred_fallthru
      _
    // Predicated region
    $region14: #{swiglu.1} parent=1 // pred_check
      _
    $region15: #{swiglu.1} parent=1 // pred_check_branch
      %18 = sbr.rel (0) target = $region17
    $region16: #{swiglu.1} parent=1 // pred_region
      _
    $region17: #{swiglu.1} parent=1 // pred_fallthru
      _
    // Predicated region
    $region18: #{swiglu.1} parent=1 // pred_check
      _
    $region19: #{swiglu.1} parent=1 // pred_check_branch
      %20 = sbr.rel (0) target = $region21
    $region20: #{swiglu.1} parent=1 // pred_region
      _
    $region21: #{swiglu.1} parent=1 // pred_fallthru
      _
    %p21 = scmp.eq.s32.totalorder 0, 0
    // Predicated region
    $region22: #{swiglu.1} parent=1 // pred_check
      %p22 = pneg %p21
    $region23: #{swiglu.1} parent=1 // pred_check_branch
      %24 = sbr.rel (%p22) target = $region25
    $region24: #{swiglu.1} parent=1 // pred_region
      %vm25 = vcmask 392192
      %26 = vst.msk [vmem:[#allocation2] sm:$0xff] %vm25, 0.0
      %27 = vst.msk [vmem:[#allocation2 + $0x8] sm:$0xff] %vm25, 0.0
    $region25: #{swiglu.1} parent=1 // pred_fallthru
      _
    %v28 = vld [vmem:[%s0] sm:$0xff]
    %v29 = vld [vmem:[%s0 + $0x8] sm:$0xff]
    %v30 = vld [vmem:[%s1] sm:$0xff]
    %v31 = vld [vmem:[%s1 + $0x8] sm:$0xff]
    %v32 = vld [vmem:[%s1 + $0x10] sm:$0xff]
    %v33 = vld [vmem:[%s1 + $0x18] sm:$0xff]
    %v34 = vld [vmem:[%s1 + $0x20] sm:$0xff]
    %v35 = vld [vmem:[%s1 + $0x28] sm:$0xff]
    %v36 = vld [vmem:[%s1 + $0x30] sm:$0xff]
    %v37 = vld [vmem:[%s1 + $0x38] sm:$0xff]
    %v38 = vld [vmem:[%s1 + $0x40] sm:$0xff]
    %v39 = vld [vmem:[%s1 + $0x48] sm:$0xff]
    %v40 = vld [vmem:[%s1 + $0x50] sm:$0xff]
    %v41 = vld [vmem:[%s1 + $0x58] sm:$0xff]
    %v42 = vld [vmem:[%s2] sm:$0x3]
    %v44 = vperm.slane %v42, 0
    %v45 = vperm.slane %v42, 1
    %vm48 = vcmask 392192
    %v50 = vsel %vm48, %v28, 0
    %v53 = vsel %vm48, %v29, 0
    %55 = vmatpush.msra.mxu0 0.0
    %56 = vmatpush.msra.mxu0 0.0
    %57 = vmatpush.msra.mxu0 0.0
    %58 = vmatpush.msra.mxu0 0.0
    %59 = vmatpush.msra.mxu0 0.0
    %60 = vmatpush.msra.mxu0 0.0
    %61 = vmatpush.msra.mxu0 0.0
    %62 = vmatpush.msra.mxu0 0.0
    %63 = vmatpush.msra.mxu0 0.0
    %64 = vmatpush.msra.mxu0 0.0
    %65 = vmatpush.msra.mxu0 %v40
    %66 = vmatpush.msra.mxu0 %v38
    %67 = vmatpush.msra.mxu0 %v36
    %68 = vmatpush.msra.mxu0 %v34
    %69 = vmatpush.msra.mxu0 %v32
    %70 = vmatpush.msra.mxu0 %v30
    %71 = vmatmul.f32.gmra.mxu0 %v50
    %v72 = vpop.f32.mrf.mxu0
    %v73 = vadd.f32 %v44, %v72
    %74 = vmatmul.f32.gmra.mxu0 %v53
    %v75 = vpop.f32.mrf.mxu0
    %v76 = vadd.f32 %v44, %v75
    %77 = vdwg.mxu0
    %78 = vmatpush.msra.mxu0 0.0
    %79 = vmatpush.msra.mxu0 0.0
    %80 = vmatpush.msra.mxu0 0.0
    %81 = vmatpush.msra.mxu0 0.0
    %82 = vmatpush.msra.mxu0 0.0
    %83 = vmatpush.msra.mxu0 0.0
    %84 = vmatpush.msra.mxu0 0.0
    %85 = vmatpush.msra.mxu0 0.0
    %86 = vmatpush.msra.mxu0 0.0
    %87 = vmatpush.msra.mxu0 0.0
    %88 = vmatpush.msra.mxu0 %v41
    %89 = vmatpush.msra.mxu0 %v39
    %90 = vmatpush.msra.mxu0 %v37
    %91 = vmatpush.msra.mxu0 %v35
    %92 = vmatpush.msra.mxu0 %v33
    %93 = vmatpush.msra.mxu0 %v31
    %94 = vmatmul.f32.gmra.mxu0 %v50
    %v95 = vpop.f32.mrf.mxu0
    %v96 = vadd.f32 %v45, %v95
    %97 = vmatmul.f32.gmra.mxu0 %v53
    %v98 = vpop.f32.mrf.mxu0
    %v99 = vadd.f32 %v45, %v98
    %100 = vdwg.mxu0
    %v101 = vxor.u32 %v73, 2147483648
    %v102 = vxor.u32 %v76, 2147483648
    %v103 = vmul.f32 %v101, 1.442695
    %v104 = vpow.pop %v103
    %v105 = vmul.f32 %v102, 1.442695
    %v106 = vpow.pop %v105
    %v107 = vadd.f32 %v104, 1.0
    %v108 = vadd.f32 %v106, 1.0
    %v109 = vrcp.pop %v107
    %v110 = vmul.f32 %v107, %v109
    %v111 = vsub.f32 1.0, %v110
    %v112 = vmul.f32 %v109, %v111
    %v113 = vadd.f32 %v109, %v112
    %vm114 = vweird.f32 %v107
    %vm115 = vweird.f32 %v109
    %vm116 = vmor %vm114, %vm115
    %v117 = vsel %vm116, %v109, %v113
    %v118 = vand.u32 2147483647, %v107
    %vm119 = vcmp.eq.f32.partialorder %v118, 8.507059e+37
    %v120 = vand.u32 %v107, 2147483648
    %v121 = vor.u32 1.1754944e-38, %v120
    %v122 = vsel %vm119, %v121, %v117
    %v123 = vmul.f32 1.0, %v122
    %v124 = vrcp.pop %v108
    %v125 = vmul.f32 %v108, %v124
    %v126 = vsub.f32 1.0, %v125
    %v127 = vmul.f32 %v124, %v126
    %v128 = vadd.f32 %v124, %v127
    %vm129 = vweird.f32 %v108
    %vm130 = vweird.f32 %v124
    %vm131 = vmor %vm129, %vm130
    %v132 = vsel %vm131, %v124, %v128
    %v133 = vand.u32 2147483647, %v108
    %vm134 = vcmp.eq.f32.partialorder %v133, 8.507059e+37
    %v135 = vand.u32 %v108, 2147483648
    %v136 = vor.u32 1.1754944e-38, %v135
    %v137 = vsel %vm134, %v136, %v132
    %v138 = vmul.f32 1.0, %v137
    %v139 = vmul.f32 %v73, %v123
    %v140 = vmul.f32 %v76, %v138
    %v141 = vmul.f32 %v139, %v96
    %v142 = vmul.f32 %v140, %v99
    %v143 = vld [vmem:[#allocation2] sm:$0xff]
    %v144 = vld [vmem:[#allocation2 + $0x8] sm:$0xff]
    %v145 = vld [vmem:[%s3] sm:$0xff]
    %v146 = vld [vmem:[%s3 + $0x8] sm:$0xff]
    %v147 = vld [vmem:[%s3 + $0x10] sm:$0xff]
    %v148 = vld [vmem:[%s3 + $0x18] sm:$0xff]
    %v149 = vld [vmem:[%s3 + $0x20] sm:$0xff]
    %v150 = vld [vmem:[%s3 + $0x28] sm:$0xff]
    %v151 = vld [vmem:[%s3 + $0x30] sm:$0xff]
    %v152 = vld [vmem:[%s3 + $0x38] sm:$0xff]
    %v153 = vld [vmem:[%s3 + $0x40] sm:$0xff]
    %v154 = vld [vmem:[%s3 + $0x48] sm:$0xff]
    %v155 = vld [vmem:[%s3 + $0x50] sm:$0xff]
    %v156 = vld [vmem:[%s3 + $0x58] sm:$0xff]
    %v157 = vld [vmem:[%s3 + $0x60] sm:$0xff]
    %v158 = vld [vmem:[%s3 + $0x68] sm:$0xff]
    %v159 = vld [vmem:[%s3 + $0x70] sm:$0xff]
    %v160 = vld [vmem:[%s3 + $0x78] sm:$0xff]
    %161 = vmatpush.msra.mxu0 %v160
    %162 = vmatpush.msra.mxu0 %v159
    %163 = vmatpush.msra.mxu0 %v158
    %164 = vmatpush.msra.mxu0 %v157
    %165 = vmatpush.msra.mxu0 %v156
    %166 = vmatpush.msra.mxu0 %v155
    %167 = vmatpush.msra.mxu0 %v154
    %168 = vmatpush.msra.mxu0 %v153
    %169 = vmatpush.msra.mxu0 %v152
    %170 = vmatpush.msra.mxu0 %v151
    %171 = vmatpush.msra.mxu0 %v150
    %172 = vmatpush.msra.mxu0 %v149
    %173 = vmatpush.msra.mxu0 %v148
    %174 = vmatpush.msra.mxu0 %v147
    %175 = vmatpush.msra.mxu0 %v146
    %176 = vmatpush.msra.mxu0 %v145
    %177 = vmatmul.f32.gmra.mxu0 %v141
    %v178 = vpop.f32.mrf.mxu0
    %v179 = vadd.f32 0.0, %v178
    %180 = vmatmul.f32.gmra.mxu0 %v142
    %v181 = vpop.f32.mrf.mxu0
    %v182 = vadd.f32 0.0, %v181
    %183 = vdwg.mxu0
    %v184 = vadd.f32 %v143, %v179
    %v185 = vadd.f32 %v144, %v182
    %186 = vst.msk [vmem:[#allocation2] sm:$0xff] %vm48, %v184
    %187 = vst.msk [vmem:[#allocation2 + $0x8] sm:$0xff] %vm48, %v185
    // Predicated region
    $region26: #{swiglu.1} parent=1 // pred_check
      %p188 = pneg %p21
    $region27: #{swiglu.1} parent=1 // pred_check_branch
      %190 = sbr.rel (%p188) target = $region29
    $region28: #{swiglu.1} parent=1 // pred_region
      %v191 = vld [vmem:[#allocation2] sm:$0xff]
      %v192 = vld [vmem:[#allocation2 + $0x8] sm:$0xff]
      %v193 = vld [vmem:[%s4] sm:$0x1]
      %v195 = vperm.slane %v193, 0
      %v197 = vadd.f32 %v191, %v195
      %v198 = vadd.f32 %v192, %v195
      %199 = vst.msk [vmem:[#allocation3] sm:$0xff] %vm48, %v197
      %200 = vst.msk [vmem:[#allocation3 + $0x8] sm:$0xff] %vm48, %v198
    $region29: #{swiglu.1} parent=1 // pred_fallthru
      _
    // Predicated region
    $region30: #{swiglu.1} parent=1 // pred_check
      _
    $region31: #{swiglu.1} parent=1 // pred_check_branch
      %202 = sbr.rel (0) target = $region33
    $region32: #{swiglu.1} parent=1 // pred_region
      %204 = vsyncadd [#allocation4], 0
      %s205 = sshll.u32 [#allocation3], 4
      %s206 = int_to_ptr.vmem [resolvable:$true] %s205
      %s207 = sshll.u32 %s5, 4
      %s208 = int_to_ptr.hbm [resolvable:$true] %s207
      %213 = dma.vmem_to_hbm [thread:$0]  %s206, 256, %s208, [#allocation4], 128, 128, 8
    $region33: #{swiglu.1} parent=1 // pred_fallthru
      _
    // Predicated region
    $region34: #{swiglu.1} parent=1 // pred_check
      _
    $region35: #{swiglu.1} parent=1 // pred_check_branch
      %215 = sbr.rel (0) target = $region37
    $region36: #{swiglu.1} parent=1 // pred_region
      %217 = dma.done [#allocation4], 256
    $region37: #{swiglu.1} parent=1 // pred_fallthru
      _
    %218 = vsyncpa [#allocation4], 1

</llo_original>
